<compile_context>
chip_gen: v5e
topology: v5e:2x2
jax: 0.10.0
libtpu: 0.0.40
codegen_flags: <defaults>
</compile_context>

<pallas_src>
import functools

import jax
import jax.numpy as jnp
from jax.experimental import pallas as pl
from jax.experimental.pallas import tpu as pltpu

_LANE = 128
_SUBLANE = 8
_MAX_TILE_M = 256  # safe on v7x (64 MiB VMEM) with double-buffering


def _round_up(v, m):
    return (v + m - 1) // m * m


def _fused_mlp_kernel(*refs, num_layers, activations):
    """refs = (x_ref, w0_ref, ..., w{L-1}_ref, b_ref, o_ref).

    x_ref:  (TILE_M, K0_pad)
    wi_ref: (Ki_pad, Ni_pad)   -- pre-transposed, zero-padded, lane-dense
    b_ref:  (num_layers, N_pad_max)
    o_ref:  (TILE_M, N_last_pad)
    """
    x_ref = refs[0]
    w_refs = refs[1:1 + num_layers]
    b_ref = refs[1 + num_layers]
    o_ref = refs[2 + num_layers]

    h = x_ref[...]  # keep operand dtype for the MXU; accumulate in f32 below
    for i in range(num_layers):
        w = w_refs[i][...]
        n_pad = w.shape[1]
        y = jnp.dot(h, w, preferred_element_type=jnp.float32)
        y = y + b_ref[i:i + 1, :n_pad]  # (1, n_pad) broadcast over rows, f32
        act = activations[i]
        if act == "relu":
            y = jnp.maximum(y, 0.0)
        elif act == "sigmoid":
            y = jax.nn.sigmoid(y)
        h = y  # stays f32 between layers; no per-layer casts
    o_ref[...] = h.astype(o_ref.dtype)


class MLP:
    """JAX/Pallas reimplementation of segment_anything's MLP module."""

    def __init__(self, input_dim, hidden_dim, output_dim, num_layers,
                 sigmoid_output=False, key=None, dtype=jnp.float32):
        self.num_layers = num_layers
        self.sigmoid_output = sigmoid_output
        self.input_dim = input_dim
        self.output_dim = output_dim
        self.dtype = dtype

        h = [hidden_dim] * (num_layers - 1)
        self.in_dims = [input_dim] + h
        self.out_dims = h + [output_dim]

        if key is None:
            key = jax.random.PRNGKey(0)

        # Raw (unpadded) params, kept for the plain-JAX reference.
        self.weights_t = []   # (in, out)
        self.biases = []      # (out,)
        # Lane-dense padded params consumed by the fused kernel.
        self.weights_t_pad = []  # (in_pad, out_pad), zero-padded

        for n_in, n_out in zip(self.in_dims, self.out_dims):
            key, kw, kb = jax.random.split(key, 3)
            # deterministic init mimicking nn.Linear's uniform(-1/sqrt(in), 1/sqrt(in))
            bound = 1.0 / jnp.sqrt(jnp.asarray(n_in, dtype))
            w = jax.random.uniform(kw, (n_out, n_in), dtype, -bound, bound)
            b = jax.random.uniform(kb, (n_out,), dtype, -bound, bound)
            w_t = jnp.transpose(w)  # (in, out)
            self.weights_t.append(w_t)
            self.biases.append(b)

            k_pad = _round_up(n_in, _LANE)
            n_pad = _round_up(n_out, _LANE)
            self.weights_t_pad.append(
                jnp.pad(w_t, ((0, k_pad - n_in), (0, n_pad - n_out))))

        # Stack biases into one lane-dense (num_layers, N_pad_max) f32 array.
        n_pad_max = max(_round_up(n, _LANE) for n in self.out_dims)
        b_rows = [jnp.pad(b.astype(jnp.float32), (0, n_pad_max - b.shape[0]))
                  for b in self.biases]
        self.biases_pad = jnp.stack(b_rows, axis=0)  # (L, N_pad_max)

        # Per-layer activation tags (fused into the kernel body).
        acts = ["relu"] * (num_layers - 1)
        acts.append("sigmoid" if sigmoid_output else "none")
        self.activations = tuple(acts)

        self.k0_pad = _round_up(input_dim, _LANE)
        self.n_last_pad = _round_up(output_dim, _LANE)

    def __call__(self, x):
        lead_shape = x.shape[:-1]
        x2d = x.reshape(-1, x.shape[-1])
        M, K = x2d.shape
        assert K == self.input_dim

        # Row tiling: single block for small M, 256-row tiles (parallel grid)
        # for large M.
        if M <= _MAX_TILE_M:
            tile_m = _round_up(M, _SUBLANE)
            m_pad = tile_m
        else:
            tile_m = _MAX_TILE_M
            m_pad = _round_up(M, tile_m)
        grid = (m_pad // tile_m,)

        x_pad = jnp.pad(x2d, ((0, m_pad - M), (0, self.k0_pad - K)))

        # BlockSpecs: x and out tiled over rows; weights/biases are whole-array
        # blocks resident in VMEM for every grid step.
        in_specs = [pl.BlockSpec((tile_m, self.k0_pad), lambda i: (i, 0))]
        for w in self.weights_t_pad:
            kp, np_ = w.shape
            in_specs.append(pl.BlockSpec((kp, np_), lambda i: (0, 0)))
        in_specs.append(
            pl.BlockSpec(self.biases_pad.shape, lambda i: (0, 0)))
        out_specs = pl.BlockSpec((tile_m, self.n_last_pad), lambda i: (i, 0))

        # Advisory cost estimate (actual math, not padded) so XLA schedules
        # surrounding work around this tiny custom call.
        flops = sum(2 * M * k * n for k, n in zip(self.in_dims, self.out_dims))
        transcendentals = M * self.output_dim if self.sigmoid_output else 0
        itemsize = jnp.dtype(self.dtype).itemsize
        bytes_accessed = (
            x_pad.size * itemsize
            + sum(w.size * itemsize for w in self.weights_t_pad)
            + self.biases_pad.size * 4
            + m_pad * self.n_last_pad * itemsize)

        kernel = functools.partial(
            _fused_mlp_kernel,
            num_layers=self.num_layers,
            activations=self.activations,
        )

        out_pad = pl.pallas_call(
            kernel,
            out_shape=jax.ShapeDtypeStruct((m_pad, self.n_last_pad), x2d.dtype),
            grid=grid,
            in_specs=in_specs,
            out_specs=out_specs,
            compiler_params=pltpu.CompilerParams(
                dimension_semantics=("parallel",)),
            cost_estimate=pl.CostEstimate(
                flops=flops,
                transcendentals=transcendentals,
                bytes_accessed=bytes_accessed),
        )(x_pad, *self.weights_t_pad, self.biases_pad)

        out = out_pad[:M, :self.output_dim]
        return out.reshape(*lead_shape, self.output_dim)


def _reference_mlp(mlp: MLP, x):
    """Plain-JAX reference for correctness check."""
    x2d = x.reshape(-1, x.shape[-1])
    for i, (w_t, b) in enumerate(zip(mlp.weights_t, mlp.biases)):
        x2d = x2d @ w_t + b
        if i < mlp.num_layers - 1:
            x2d = jnp.maximum(x2d, 0.0)
    if mlp.sigmoid_output:
        x2d = jax.nn.sigmoid(x2d)
    return x2d.reshape(*x.shape[:-1], x2d.shape[-1])


if __name__ == "__main__":
    key = jax.random.PRNGKey(0)
    k_x, k_p = jax.random.split(key)

    batch, tokens = 2, 8
    input_dim, hidden_dim, output_dim, num_layers = 32, 32, 16, 3

    x = jax.random.normal(k_x, (batch, tokens, input_dim), jnp.float32)

    mlp = MLP(input_dim, hidden_dim, output_dim, num_layers,
              sigmoid_output=True, key=k_p)

    out = mlp(x)
    out = jax.block_until_ready(out)

    ref = _reference_mlp(mlp, x)
    assert out.shape == (batch, tokens, output_dim)
    assert jnp.allclose(out, ref, atol=1e-5, rtol=1e-5)

    print("KERNEL_OK")
</pallas_src>

<mosaic_0001>
module attributes {stable_mosaic.version = 11 : i64} {
  func.func @_fused_mlp_kernel(%arg0: i32, %arg1: memref<16x128xf32, #tpu.memory_space<vmem>>, %arg2: memref<128x128xf32, #tpu.memory_space<vmem>>, %arg3: memref<128x128xf32, #tpu.memory_space<vmem>>, %arg4: memref<128x128xf32, #tpu.memory_space<vmem>>, %arg5: memref<3x128xf32, #tpu.memory_space<vmem>>, %arg6: memref<16x128xf32, #tpu.memory_space<vmem>>) attributes {dimension_semantics = [#tpu.dimension_semantics<parallel>], iteration_bounds = array<i64: 1>, scalar_prefetch = 0 : i64, scratch_operands = 0 : i64, tpu.core_type = #tpu.core_type<tc>, window_params = [{transform_indices = @transform_0, window_bounds = array<i64: 16, 128>}, {pipeline_mode = #tpu.pipeline_mode<synchronous>, transform_indices = @transform_1, window_bounds = array<i64: 128, 128>}, {pipeline_mode = #tpu.pipeline_mode<synchronous>, transform_indices = @transform_2, window_bounds = array<i64: 128, 128>}, {pipeline_mode = #tpu.pipeline_mode<synchronous>, transform_indices = @transform_3, window_bounds = array<i64: 128, 128>}, {pipeline_mode = #tpu.pipeline_mode<synchronous>, transform_indices = @transform_4, window_bounds = array<i64: 3, 128>}, {transform_indices = @transform_5, window_bounds = array<i64: 16, 128>}]} {
    %c0 = arith.constant 0 : index
    %c0_0 = arith.constant 0 : index
    %0 = vector.load %arg1[%c0, %c0_0] : memref<16x128xf32, #tpu.memory_space<vmem>>, vector<16x128xf32>
    %c0_1 = arith.constant 0 : index
    %c0_2 = arith.constant 0 : index
    %1 = vector.load %arg2[%c0_1, %c0_2] : memref<128x128xf32, #tpu.memory_space<vmem>>, vector<128x128xf32>
    %cst = arith.constant dense<0.000000e+00> : vector<16x128xf32>
    %2 = tpu.matmul %0, %1, %cst {dimension_numbers = #tpu.dot_dimension_numbers<[1], [0], [0], [1], [0, 0, 1, 1], [], []>} : vector<16x128xf32>, vector<128x128xf32>, vector<16x128xf32> -> vector<16x128xf32>
    %c0_3 = arith.constant 0 : index
    %c0_4 = arith.constant 0 : index
    %3 = vector.load %arg5[%c0_3, %c0_4] : memref<3x128xf32, #tpu.memory_space<vmem>>, vector<1x128xf32>
    %4 = vector.broadcast %3 : vector<1x128xf32> to vector<16x128xf32>
    %5 = arith.addf %2, %4 : vector<16x128xf32>
    %cst_5 = arith.constant 0.000000e+00 : f32
    %6 = vector.broadcast %cst_5 : f32 to vector<16x128xf32>
    %7 = arith.maximumf %5, %6 : vector<16x128xf32>
    %c0_6 = arith.constant 0 : index
    %c0_7 = arith.constant 0 : index
    %8 = vector.load %arg3[%c0_6, %c0_7] : memref<128x128xf32, #tpu.memory_space<vmem>>, vector<128x128xf32>
    %cst_8 = arith.constant dense<0.000000e+00> : vector<16x128xf32>
    %9 = tpu.matmul %7, %8, %cst_8 {dimension_numbers = #tpu.dot_dimension_numbers<[1], [0], [0], [1], [0, 0, 1, 1], [], []>} : vector<16x128xf32>, vector<128x128xf32>, vector<16x128xf32> -> vector<16x128xf32>
    %c1 = arith.constant 1 : index
    %c0_9 = arith.constant 0 : index
    %10 = vector.load %arg5[%c1, %c0_9] : memref<3x128xf32, #tpu.memory_space<vmem>>, vector<1x128xf32>
    %11 = vector.broadcast %10 : vector<1x128xf32> to vector<16x128xf32>
    %12 = arith.addf %9, %11 : vector<16x128xf32>
    %cst_10 = arith.constant 0.000000e+00 : f32
    %13 = vector.broadcast %cst_10 : f32 to vector<16x128xf32>
    %14 = arith.maximumf %12, %13 : vector<16x128xf32>
    %c0_11 = arith.constant 0 : index
    %c0_12 = arith.constant 0 : index
    %15 = vector.load %arg4[%c0_11, %c0_12] : memref<128x128xf32, #tpu.memory_space<vmem>>, vector<128x128xf32>
    %cst_13 = arith.constant dense<0.000000e+00> : vector<16x128xf32>
    %16 = tpu.matmul %14, %15, %cst_13 {dimension_numbers = #tpu.dot_dimension_numbers<[1], [0], [0], [1], [0, 0, 1, 1], [], []>} : vector<16x128xf32>, vector<128x128xf32>, vector<16x128xf32> -> vector<16x128xf32>
    %c2 = arith.constant 2 : index
    %c0_14 = arith.constant 0 : index
    %17 = vector.load %arg5[%c2, %c0_14] : memref<3x128xf32, #tpu.memory_space<vmem>>, vector<1x128xf32>
    %18 = vector.broadcast %17 : vector<1x128xf32> to vector<16x128xf32>
    %19 = arith.addf %16, %18 : vector<16x128xf32>
    %20 = arith.negf %19 : vector<16x128xf32>
    %21 = math.exp %20 : vector<16x128xf32>
    %cst_15 = arith.constant 1.000000e+00 : f32
    %22 = vector.broadcast %cst_15 : f32 to vector<16x128xf32>
    %23 = arith.addf %22, %21 : vector<16x128xf32>
    %24 = arith.divf %22, %23 : vector<16x128xf32>
    %c0_16 = arith.constant 0 : index
    %c0_17 = arith.constant 0 : index
    %25 = vector.load %arg6[%c0_16, %c0_17] : memref<16x128xf32, #tpu.memory_space<vmem>>, vector<16x128xf32>
    tpu.vector_store %arg6[%c0_16, %c0_17], %24 {strides = array<i32>} : memref<16x128xf32, #tpu.memory_space<vmem>>, vector<16x128xf32>,
    return
  }
  func.func @transform_0(%arg0: i32) -> (i32, i32) {
    %c0_i32 = arith.constant 0 : i32
    %c0_i32_0 = arith.constant 0 : i32
    return %arg0, %c0_i32 : i32, i32
  }
  func.func @transform_1(%arg0: i32) -> (i32, i32) {
    %c0_i32 = arith.constant 0 : i32
    %c0_i32_0 = arith.constant 0 : i32
    %c0_i32_1 = arith.constant 0 : i32
    return %c0_i32, %c0_i32_0 : i32, i32
  }
  func.func @transform_2(%arg0: i32) -> (i32, i32) {
    %c0_i32 = arith.constant 0 : i32
    %c0_i32_0 = arith.constant 0 : i32
    %c0_i32_1 = arith.constant 0 : i32
    return %c0_i32, %c0_i32_0 : i32, i32
  }
  func.func @transform_3(%arg0: i32) -> (i32, i32) {
    %c0_i32 = arith.constant 0 : i32
    %c0_i32_0 = arith.constant 0 : i32
    %c0_i32_1 = arith.constant 0 : i32
    return %c0_i32, %c0_i32_0 : i32, i32
  }
  func.func @transform_4(%arg0: i32) -> (i32, i32) {
    %c0_i32 = arith.constant 0 : i32
    %c0_i32_0 = arith.constant 0 : i32
    %c0_i32_1 = arith.constant 0 : i32
    return %c0_i32, %c0_i32_0 : i32, i32
  }
  func.func @transform_5(%arg0: i32) -> (i32, i32) {
    %c0_i32 = arith.constant 0 : i32
    %c0_i32_0 = arith.constant 0 : i32
    return %arg0, %c0_i32 : i32, i32
  }
}

</mosaic_0001>

<llo_original>
// kernel: tpu_custom_call.1
$region0: #{tpu_custom_call.1}
  #allocation0 [shape = 'u32[]', space=smem, size = 0x4, offset = 0x4, fixed_abs, tag = 'smem constant byte address 0x4 - core index']
  #allocation1 [shape = 'u32[72,128]{1,0:T(1,128)}', space=vmem, size = 0x9000, scoped, tag = 'internal scratch']
  %s0 = inlined_call_operand.hbm [shape: f32[16,128], index: 0, kind: input, shape index: {}]
  %s1 = inlined_call_operand.hbm [shape: f32[128,128], index: 1, kind: input, shape index: {}]
  %s2 = inlined_call_operand.hbm [shape: f32[128,128], index: 2, kind: input, shape index: {}]
  %s3 = inlined_call_operand.hbm [shape: f32[128,128], index: 3, kind: input, shape index: {}]
  %s4 = inlined_call_operand.hbm [shape: f32[3,128], index: 4, kind: input, shape index: {}]
  %s5 = inlined_call_operand.hbm [shape: f32[16,128], index: 5, kind: output, shape index: {}]
  %s6 = sld [smem:[#allocation0]]
  $region50: #{tpu_custom_call.1} parent=0
    _
  %s8 = ssub.s32 1, %s6
  %s9 = scalar_select 0, %s8, %s6
  $region1: #{tpu_custom_call.1} parent=0
    #allocation2 [shape = 'u8[8192]{0}', space=vmem, size = 0x2000, scoped, tag = 'input window, operand 0, single buffered']
    #allocation3 [shape = 's32[1]{0}', space=sflag, size = 0x4, scoped, tag = 'scoped memory for tpu_custom_call.1']
    #allocation4 [shape = 's32[1]{0}', space=sflag, size = 0x4, scoped, tag = 'scoped memory for tpu_custom_call.1']
    #allocation5 [shape = 'u8[65536]{0}', space=vmem, size = 0x10000, scoped, tag = 'input window, operand 1, single buffered']
    #allocation6 [shape = 's32[1]{0}', space=sflag, size = 0x4, scoped, tag = 'scoped memory for tpu_custom_call.1']
    #allocation7 [shape = 'u8[65536]{0}', space=vmem, size = 0x10000, scoped, tag = 'input window, operand 2, single buffered']
    #allocation8 [shape = 'u8[65536]{0}', space=vmem, size = 0x10000, scoped, tag = 'input window, operand 3, single buffered']
    #allocation9 [shape = 's32[1]{0}', space=sflag, size = 0x4, scoped, tag = 'scoped memory for tpu_custom_call.1']
    #allocation10 [shape = 'u8[2048]{0}', space=vmem, size = 0x800, scoped, tag = 'input window, operand 4, single buffered']
    #allocation11 [shape = 'u8[8192]{0}', space=vmem, size = 0x2000, scoped, tag = 'output window, operand 0, single buffered']
    %10 = vsyncpa [#allocation3], 0
    %11 = vsyncpa [#allocation6], 0
    %12 = vsyncpa [#allocation9], 0
    %13 = vsyncpa [#allocation4], 0
    // Predicated region
    $region2: #{tpu_custom_call.1} parent=1 // pred_check
      _
    $region3: #{tpu_custom_call.1} parent=1 // pred_check_branch
      %15 = sbr.rel (0) target = $region5
    $region4: #{tpu_custom_call.1} parent=1 // pred_region
      %17 = vsyncadd [#allocation3], 0
      %s18 = sshll.u32 %s0, 4
      %s19 = int_to_ptr.hbm [resolvable:$true] %s18
      %s20 = sshll.u32 [#allocation2], 4
      %s21 = int_to_ptr.vmem [resolvable:$true] %s20
      %26 = dma.hbm_to_vmem [thread:$0]  %s19, 256, %s21, [#allocation3], 128, 128, 8
    $region5: #{tpu_custom_call.1} parent=1 // pred_fallthru
      _
    // Predicated region
    $region6: #{tpu_custom_call.1} parent=1 // pred_check
      _
    $region7: #{tpu_custom_call.1} parent=1 // pred_check_branch
      %28 = sbr.rel (0) target = $region9
    $region8: #{tpu_custom_call.1} parent=1 // pred_region
      %30 = vsyncadd [#allocation6], 0
      %s31 = sshll.u32 %s1, 4
      %s32 = int_to_ptr.hbm [resolvable:$true] %s31
      %s33 = sshll.u32 [#allocation5], 4
      %s34 = int_to_ptr.vmem [resolvable:$true] %s33
      %39 = dma.hbm_to_vmem [thread:$0]  %s32, 2048, %s34, [#allocation6], 128, 128, 8
    $region9: #{tpu_custom_call.1} parent=1 // pred_fallthru
      _
    // Predicated region
    $region10: #{tpu_custom_call.1} parent=1 // pred_check
      _
    $region11: #{tpu_custom_call.1} parent=1 // pred_check_branch
      %41 = sbr.rel (0) target = $region13
    $region12: #{tpu_custom_call.1} parent=1 // pred_region
      %43 = vsyncadd [#allocation6], 0
      %s44 = sshll.u32 %s2, 4
      %s45 = int_to_ptr.hbm [resolvable:$true] %s44
      %s46 = sshll.u32 [#allocation7], 4
      %s47 = int_to_ptr.vmem [resolvable:$true] %s46
      %52 = dma.hbm_to_vmem [thread:$0]  %s45, 2048, %s47, [#allocation6], 128, 128, 8
    $region13: #{tpu_custom_call.1} parent=1 // pred_fallthru
      _
    // Predicated region
    $region14: #{tpu_custom_call.1} parent=1 // pred_check
      _
    $region15: #{tpu_custom_call.1} parent=1 // pred_check_branch
      %54 = sbr.rel (0) target = $region17
    $region16: #{tpu_custom_call.1} parent=1 // pred_region
      %56 = vsyncadd [#allocation9], 0
      %s57 = sshll.u32 %s3, 4
      %s58 = int_to_ptr.hbm [resolvable:$true] %s57
      %s59 = sshll.u32 [#allocation8], 4
      %s60 = int_to_ptr.vmem [resolvable:$true] %s59
      %65 = dma.hbm_to_vmem [thread:$0]  %s58, 2048, %s60, [#allocation9], 128, 128, 8
    $region17: #{tpu_custom_call.1} parent=1 // pred_fallthru
      _
    // Predicated region
    $region18: #{tpu_custom_call.1} parent=1 // pred_check
      _
    $region19: #{tpu_custom_call.1} parent=1 // pred_check_branch
      %67 = sbr.rel (0) target = $region21
    $region20: #{tpu_custom_call.1} parent=1 // pred_region
      %69 = vsyncadd [#allocation9], 0
      %s71 = sshll.u32 %s4, 4
      %s72 = int_to_ptr.hbm [resolvable:$true] %s71
      %s73 = sshll.u32 [#allocation10], 4
      %s74 = int_to_ptr.vmem [resolvable:$true] %s73
      %76 = dma.hbm_to_vmem [thread:$0]  %s72, 64, %s74, [#allocation9]
    $region21: #{tpu_custom_call.1} parent=1 // pred_fallthru
      _
    // Predicated region
    $region22: #{tpu_custom_call.1} parent=1 // pred_check
      _
    $region23: #{tpu_custom_call.1} parent=1 // pred_check_branch
      %78 = sbr.rel (0) target = $region25
    $region24: #{tpu_custom_call.1} parent=1 // pred_region
      %80 = dma.done [#allocation3], 256
    $region25: #{tpu_custom_call.1} parent=1 // pred_fallthru
      _
    // Predicated region
    $region26: #{tpu_custom_call.1} parent=1 // pred_check
      _
    $region27: #{tpu_custom_call.1} parent=1 // pred_check_branch
      %82 = sbr.rel (0) target = $region29
    $region28: #{tpu_custom_call.1} parent=1 // pred_region
      %84 = dma.done [#allocation6], 2048
    $region29: #{tpu_custom_call.1} parent=1 // pred_fallthru
      _
    // Predicated region
    $region30: #{tpu_custom_call.1} parent=1 // pred_check
      _
    $region31: #{tpu_custom_call.1} parent=1 // pred_check_branch
      %86 = sbr.rel (0) target = $region33
    $region32: #{tpu_custom_call.1} parent=1 // pred_region
      %88 = dma.done [#allocation6], 2048
    $region33: #{tpu_custom_call.1} parent=1 // pred_fallthru
      _
    // Predicated region
    $region34: #{tpu_custom_call.1} parent=1 // pred_check
      _
    $region35: #{tpu_custom_call.1} parent=1 // pred_check_branch
      %90 = sbr.rel (0) target = $region37
    $region36: #{tpu_custom_call.1} parent=1 // pred_region
      %92 = dma.done [#allocation9], 2048
    $region37: #{tpu_custom_call.1} parent=1 // pred_fallthru
      _
    // Predicated region
    $region38: #{tpu_custom_call.1} parent=1 // pred_check
      _
    $region39: #{tpu_custom_call.1} parent=1 // pred_check_branch
      %94 = sbr.rel (0) target = $region41
    $region40: #{tpu_custom_call.1} parent=1 // pred_region
      %96 = dma.done [#allocation9], 64
    $region41: #{tpu_custom_call.1} parent=1 // pred_fallthru
      _
    %v97 = vld [vmem:[#allocation2] sm:$0xff]
    %v98 = vld [vmem:[#allocation2 + $0x8] sm:$0xff]
    %v99 = vld [vmem:[#allocation5] sm:$0xff]
    %v100 = vld [vmem:[#allocation5 + $0x8] sm:$0xff]
    %v101 = vld [vmem:[#allocation5 + $0x10] sm:$0xff]
    %v102 = vld [vmem:[#allocation5 + $0x18] sm:$0xff]
    %v103 = vld [vmem:[#allocation5 + $0x20] sm:$0xff]
    %v104 = vld [vmem:[#allocation5 + $0x28] sm:$0xff]
    %v105 = vld [vmem:[#allocation5 + $0x30] sm:$0xff]
    %v106 = vld [vmem:[#allocation5 + $0x38] sm:$0xff]
    %v107 = vld [vmem:[#allocation5 + $0x40] sm:$0xff]
    %v108 = vld [vmem:[#allocation5 + $0x48] sm:$0xff]
    %v109 = vld [vmem:[#allocation5 + $0x50] sm:$0xff]
    %v110 = vld [vmem:[#allocation5 + $0x58] sm:$0xff]
    %v111 = vld [vmem:[#allocation5 + $0x60] sm:$0xff]
    %v112 = vld [vmem:[#allocation5 + $0x68] sm:$0xff]
    %v113 = vld [vmem:[#allocation5 + $0x70] sm:$0xff]
    %v114 = vld [vmem:[#allocation5 + $0x78] sm:$0xff]
    %v115 = vld [vmem:[#allocation10] sm:$0x1]
    %v116 = vperm.slane %v115, 0
    %117 = vmatpush.msra.mxu0 %v114
    %118 = vmatpush.msra.mxu0 %v113
    %119 = vmatpush.msra.mxu0 %v112
    %120 = vmatpush.msra.mxu0 %v111
    %121 = vmatpush.msra.mxu0 %v110
    %122 = vmatpush.msra.mxu0 %v109
    %123 = vmatpush.msra.mxu0 %v108
    %124 = vmatpush.msra.mxu0 %v107
    %125 = vmatpush.msra.mxu0 %v106
    %126 = vmatpush.msra.mxu0 %v105
    %127 = vmatpush.msra.mxu0 %v104
    %128 = vmatpush.msra.mxu0 %v103
    %129 = vmatpush.msra.mxu0 %v102
    %130 = vmatpush.msra.mxu0 %v101
    %131 = vmatpush.msra.mxu0 %v100
    %132 = vmatpush.msra.mxu0 %v99
    %133 = vmatmul.f32.gmra.mxu0 %v97
    %v134 = vpop.f32.mrf.mxu0
    %v135 = vadd.f32 %v116, %v134
    %136 = vmatmul.f32.gmra.mxu0 %v98
    %v137 = vpop.f32.mrf.mxu0
    %v138 = vadd.f32 %v116, %v137
    %139 = vdwg.mxu0
    %v140 = vmax.f32 %v135, 0.0
    %v141 = vmax.f32 %v138, 0.0
    %v142 = vld [vmem:[#allocation7] sm:$0xff]
    %v143 = vld [vmem:[#allocation7 + $0x8] sm:$0xff]
    %v144 = vld [vmem:[#allocation7 + $0x10] sm:$0xff]
    %v145 = vld [vmem:[#allocation7 + $0x18] sm:$0xff]
    %v146 = vld [vmem:[#allocation7 + $0x20] sm:$0xff]
    %v147 = vld [vmem:[#allocation7 + $0x28] sm:$0xff]
    %v148 = vld [vmem:[#allocation7 + $0x30] sm:$0xff]
    %v149 = vld [vmem:[#allocation7 + $0x38] sm:$0xff]
    %v150 = vld [vmem:[#allocation7 + $0x40] sm:$0xff]
    %v151 = vld [vmem:[#allocation7 + $0x48] sm:$0xff]
    %v152 = vld [vmem:[#allocation7 + $0x50] sm:$0xff]
    %v153 = vld [vmem:[#allocation7 + $0x58] sm:$0xff]
    %v154 = vld [vmem:[#allocation7 + $0x60] sm:$0xff]
    %v155 = vld [vmem:[#allocation7 + $0x68] sm:$0xff]
    %v156 = vld [vmem:[#allocation7 + $0x70] sm:$0xff]
    %v157 = vld [vmem:[#allocation7 + $0x78] sm:$0xff]
    %v158 = vld [vmem:[#allocation10 + $0x1] sm:$0x1]
    %v159 = vperm.slane %v158, 0
    %160 = vmatpush.msra.mxu0 %v157
    %161 = vmatpush.msra.mxu0 %v156
    %162 = vmatpush.msra.mxu0 %v155
    %163 = vmatpush.msra.mxu0 %v154
    %164 = vmatpush.msra.mxu0 %v153
    %165 = vmatpush.msra.mxu0 %v152
    %166 = vmatpush.msra.mxu0 %v151
    %167 = vmatpush.msra.mxu0 %v150
    %168 = vmatpush.msra.mxu0 %v149
    %169 = vmatpush.msra.mxu0 %v148
    %170 = vmatpush.msra.mxu0 %v147
    %171 = vmatpush.msra.mxu0 %v146
    %172 = vmatpush.msra.mxu0 %v145
    %173 = vmatpush.msra.mxu0 %v144
    %174 = vmatpush.msra.mxu0 %v143
    %175 = vmatpush.msra.mxu0 %v142
    %176 = vmatmul.f32.gmra.mxu0 %v140
    %v177 = vpop.f32.mrf.mxu0
    %v178 = vadd.f32 %v159, %v177
    %179 = vmatmul.f32.gmra.mxu0 %v141
    %v180 = vpop.f32.mrf.mxu0
    %v181 = vadd.f32 %v159, %v180
    %182 = vdwg.mxu0
    %v183 = vmax.f32 %v178, 0.0
    %v184 = vmax.f32 %v181, 0.0
    %v185 = vld [vmem:[#allocation8] sm:$0xff]
    %v186 = vld [vmem:[#allocation8 + $0x8] sm:$0xff]
    %v187 = vld [vmem:[#allocation8 + $0x10] sm:$0xff]
    %v188 = vld [vmem:[#allocation8 + $0x18] sm:$0xff]
    %v189 = vld [vmem:[#allocation8 + $0x20] sm:$0xff]
    %v190 = vld [vmem:[#allocation8 + $0x28] sm:$0xff]
    %v191 = vld [vmem:[#allocation8 + $0x30] sm:$0xff]
    %v192 = vld [vmem:[#allocation8 + $0x38] sm:$0xff]
    %v193 = vld [vmem:[#allocation8 + $0x40] sm:$0xff]
    %v194 = vld [vmem:[#allocation8 + $0x48] sm:$0xff]
    %v195 = vld [vmem:[#allocation8 + $0x50] sm:$0xff]
    %v196 = vld [vmem:[#allocation8 + $0x58] sm:$0xff]
    %v197 = vld [vmem:[#allocation8 + $0x60] sm:$0xff]
    %v198 = vld [vmem:[#allocation8 + $0x68] sm:$0xff]
    %v199 = vld [vmem:[#allocation8 + $0x70] sm:$0xff]
    %v200 = vld [vmem:[#allocation8 + $0x78] sm:$0xff]
    %v201 = vld [vmem:[#allocation10 + $0x2] sm:$0x1]
    %v202 = vperm.slane %v201, 0
    %203 = vmatpush.msra.mxu0 %v200
    %204 = vmatpush.msra.mxu0 %v199
    %205 = vmatpush.msra.mxu0 %v198
    %206 = vmatpush.msra.mxu0 %v197
    %207 = vmatpush.msra.mxu0 %v196
    %208 = vmatpush.msra.mxu0 %v195
    %209 = vmatpush.msra.mxu0 %v194
    %210 = vmatpush.msra.mxu0 %v193
    %211 = vmatpush.msra.mxu0 %v192
    %212 = vmatpush.msra.mxu0 %v191
    %213 = vmatpush.msra.mxu0 %v190
    %214 = vmatpush.msra.mxu0 %v189
    %215 = vmatpush.msra.mxu0 %v188
    %216 = vmatpush.msra.mxu0 %v187
    %217 = vmatpush.msra.mxu0 %v186
    %218 = vmatpush.msra.mxu0 %v185
    %219 = vmatmul.f32.gmra.mxu0 %v183
    %v220 = vpop.f32.mrf.mxu0
    %v221 = vadd.f32 %v202, %v220
    %222 = vmatmul.f32.gmra.mxu0 %v184
    %v223 = vpop.f32.mrf.mxu0
    %v224 = vadd.f32 %v202, %v223
    %225 = vdwg.mxu0
    %v226 = vxor.u32 %v221, 2147483648
    %v227 = vxor.u32 %v224, 2147483648
    %v228 = vmul.f32 %v226, 1.442695
    %v229 = vpow.pop %v228
    %v230 = vmul.f32 %v227, 1.442695
    %v231 = vpow.pop %v230
    %v232 = vadd.f32 %v229, 1.0
    %v233 = vadd.f32 %v231, 1.0
    %v234 = vrcp.pop %v232
    %v235 = vmul.f32 %v232, %v234
    %v236 = vsub.f32 1.0, %v235
    %v237 = vmul.f32 %v234, %v236
    %v238 = vadd.f32 %v234, %v237
    %vm239 = vweird.f32 %v232
    %vm240 = vweird.f32 %v234
    %vm241 = vmor %vm239, %vm240
    %v242 = vsel %vm241, %v234, %v238
    %v243 = vand.u32 2147483647, %v232
    %vm244 = vcmp.eq.f32.partialorder %v243, 8.507059e+37
    %v245 = vand.u32 %v232, 2147483648
    %v246 = vor.u32 1.1754944e-38, %v245
    %v247 = vsel %vm244, %v246, %v242
    %v248 = vmul.f32 1.0, %v247
    %v249 = vrcp.pop %v233
    %v250 = vmul.f32 %v233, %v249
    %v251 = vsub.f32 1.0, %v250
    %v252 = vmul.f32 %v249, %v251
    %v253 = vadd.f32 %v249, %v252
    %vm254 = vweird.f32 %v233
    %vm255 = vweird.f32 %v249
    %vm256 = vmor %vm254, %vm255
    %v257 = vsel %vm256, %v249, %v253
    %v258 = vand.u32 2147483647, %v233
    %vm259 = vcmp.eq.f32.partialorder %v258, 8.507059e+37
    %v260 = vand.u32 %v233, 2147483648
    %v261 = vor.u32 1.1754944e-38, %v260
    %v262 = vsel %vm259, %v261, %v257
    %v263 = vmul.f32 1.0, %v262
    %264 = vst [vmem:[#allocation11] sm:$0xff] %v248
    %265 = vst [vmem:[#allocation11 + $0x8] sm:$0xff] %v263
    // Predicated region
    $region42: #{tpu_custom_call.1} parent=1 // pred_check
      _
    $region43: #{tpu_custom_call.1} parent=1 // pred_check_branch
      %267 = sbr.rel (0) target = $region45
    $region44: #{tpu_custom_call.1} parent=1 // pred_region
      %269 = vsyncadd [#allocation4], 0
      %s270 = sshll.u32 [#allocation11], 4
      %s271 = int_to_ptr.vmem [resolvable:$true] %s270
      %s272 = sshll.u32 %s5, 4
      %s273 = int_to_ptr.hbm [resolvable:$true] %s272
      %278 = dma.vmem_to_hbm [thread:$0]  %s271, 256, %s273, [#allocation4], 128, 128, 8
    $region45: #{tpu_custom_call.1} parent=1 // pred_fallthru
      _
    // Predicated region
    $region46: #{tpu_custom_call.1} parent=1 // pred_check
      _
    $region47: #{tpu_custom_call.1} parent=1 // pred_check_branch
      %280 = sbr.rel (0) target = $region49
    $region48: #{tpu_custom_call.1} parent=1 // pred_region
      %282 = dma.done [#allocation4], 256
    $region49: #{tpu_custom_call.1} parent=1 // pred_fallthru
      _
    %283 = vsyncpa [#allocation3], 1
    %284 = vsyncpa [#allocation6], 1
    %285 = vsyncpa [#allocation9], 1
    %286 = vsyncpa [#allocation4], 1

</llo_original>
